<compile_context>
chip_gen: v6e
topology: v6e:2x2x1
jax: 0.10.0
libtpu: 0.0.40
codegen_flags: <defaults>
</compile_context>

<pallas_src>
import functools

import jax
import jax.numpy as jnp
from jax import lax
from jax.experimental import pallas as pl
from jax.experimental.pallas import tpu as pltpu


def _round_up(x, m):
    return (x + m - 1) // m * m


def _dualnet_kernel(x_ref, w_ref, b_ref, out_ref, *, out_dim):
    """x_ref: [TB, in_dim]; w_ref: [in_dim, N] (pre-transposed, heads packed at
    column out_dim); b_ref: [1, N] (f32); out_ref: [TB, N] (f32).

    Output columns [0, out_dim)         -> mu    = tanh(z)
    Output columns [out_dim, 2*out_dim) -> sigma = softplus(z) + 1e-5
    Columns >= 2*out_dim are padding and sliced off by the wrapper.
    """
    x = x_ref[...]
    if x.dtype != w_ref.dtype:
        x = x.astype(w_ref.dtype)            # bf16 matmul path (optional)

    # Standard [M,K] @ [K,N] contraction on the MXU; f32 accumulation.
    z = lax.dot_general(
        x, w_ref[...],
        dimension_numbers=(((1,), (0,)), ((), ())),
        preferred_element_type=jnp.float32,
    ) + b_ref[...]                            # [TB, N] f32

    if out_dim % 128 == 0:
        # Head boundary is lane-aligned: aligned slices, no per-lane select,
        # each transcendental computed only on its own head's lanes.
        z_mu = z[:, :out_dim]
        z_sig = z[:, out_dim:]
        out_ref[:, :out_dim] = jnp.tanh(z_mu).astype(out_ref.dtype)
        sp = jnp.maximum(z_sig, 0.0) + jnp.log1p(jnp.exp(-jnp.abs(z_sig)))
        out_ref[:, out_dim:] = (sp + 1e-5).astype(out_ref.dtype)
    else:
        # Packed heads inside one 128-lane-aligned slab: per-lane head select.
        mu = jnp.tanh(z)
        sp = jnp.maximum(z, 0.0) + jnp.log1p(jnp.exp(-jnp.abs(z)))  # stable softplus
        col = lax.broadcasted_iota(jnp.int32, z.shape, 1)
        out_ref[...] = jnp.where(col < out_dim, mu, sp + 1e-5).astype(out_ref.dtype)


def prepare_params(w_mu, b_mu, w_sigma, b_sigma, *, matmul_dtype=jnp.float32):
    """One-time packing of the two nn.Linear heads (PyTorch [out, in] layout).

    Returns (w_cat [in_dim, N], b_cat [1, N], out_dim) with
    N = round_up(2*out_dim, 128); mu head in columns [0, out_dim),
    sigma head in [out_dim, 2*out_dim), zero padding beyond.
    Call this ONCE per set of parameters (it is hoisted out of the forward).
    """
    out_dim, in_dim = w_mu.shape
    f32 = jnp.float32
    N = _round_up(2 * out_dim, 128)

    w = jnp.concatenate([jnp.asarray(w_mu, f32), jnp.asarray(w_sigma, f32)],
                        axis=0)                                     # [2*out, in]
    w_cat = jnp.zeros((in_dim, N), f32).at[:, : 2 * out_dim].set(w.T)
    w_cat = w_cat.astype(matmul_dtype)     # bf16 option for v6e/v7x MXU / DMA

    b = jnp.concatenate([jnp.asarray(b_mu, f32), jnp.asarray(b_sigma, f32)],
                        axis=0)
    b_cat = jnp.zeros((1, N), f32).at[0, : 2 * out_dim].set(b)      # bias stays f32
    return w_cat, b_cat, out_dim


def dualnet_forward(x, w_cat, b_cat, out_dim, *, batch_tile=1024):
    """x: [B, in_dim]; (w_cat, b_cat, out_dim) from prepare_params.
    Returns (mu, sigma), both [B, out_dim] float32."""
    B, in_dim = x.shape
    assert w_cat.shape[0] == in_dim
    N = w_cat.shape[1]
    f32 = jnp.float32

    x = jnp.asarray(x, f32)

    # Only pad the batch to a sublane multiple (8). No padding to the tile size:
    # the ragged final grid step is masked by Pallas, so we avoid a full extra
    # HBM read+write of x per call.
    Bp = _round_up(B, 8)
    if Bp != B:
        x = jnp.pad(x, ((0, Bp - B), (0, 0)))

    TB = min(_round_up(batch_tile, 8), Bp)
    # v7x has 2 TensorCores: make sure the "parallel" batch axis has >= 2 grid
    # steps whenever there is more than one sublane-tile of rows.
    if TB >= Bp and Bp > 8:
        TB = _round_up(pl.cdiv(Bp, 2), 8)
    grid = (pl.cdiv(Bp, TB),)

    # Scoped-VMEM budget: double-buffered x & out tiles, resident weights+bias
    # (2 buffers each), plus the z intermediate; generous 2x headroom.
    est = (2 * TB * in_dim * 4
           + 2 * TB * N * 4
           + 2 * (in_dim * N * w_cat.dtype.itemsize + N * 4)
           + TB * N * 4)
    vmem_limit = int(max(2 * est, 16 * 1024 * 1024))

    out = pl.pallas_call(
        functools.partial(_dualnet_kernel, out_dim=out_dim),
        out_shape=jax.ShapeDtypeStruct((Bp, N), f32),
        grid=grid,
        in_specs=[
            pl.BlockSpec((TB, in_dim), lambda i: (i, 0)),   # x: tiled over batch
            pl.BlockSpec((in_dim, N), lambda i: (0, 0)),    # fused W: VMEM-resident
            pl.BlockSpec((1, N), lambda i: (0, 0)),         # fused b: VMEM-resident
        ],
        out_specs=pl.BlockSpec((TB, N), lambda i: (i, 0)),
        compiler_params=pltpu.CompilerParams(
            dimension_semantics=("parallel",),
            vmem_limit_bytes=vmem_limit,
        ),
    )(x, w_cat, b_cat)

    mu = out[:B, :out_dim]
    sigma = out[:B, out_dim: 2 * out_dim]
    return mu, sigma


def init_params(key, in_dim, out_dim):
    """Deterministic init mimicking nn.Linear's uniform(-1/sqrt(in), 1/sqrt(in))."""
    k1, k2, k3, k4 = jax.random.split(key, 4)
    bound = 1.0 / jnp.sqrt(in_dim)
    w_mu = jax.random.uniform(k1, (out_dim, in_dim), jnp.float32, -bound, bound)
    b_mu = jax.random.uniform(k2, (out_dim,), jnp.float32, -bound, bound)
    w_sigma = jax.random.uniform(k3, (out_dim, in_dim), jnp.float32, -bound, bound)
    b_sigma = jax.random.uniform(k4, (out_dim,), jnp.float32, -bound, bound)
    return w_mu, b_mu, w_sigma, b_sigma


if __name__ == "__main__":
    key = jax.random.PRNGKey(0)
    kx, kp = jax.random.split(key)

    batch, in_dim, out_dim = 8, 32, 32
    x = jax.random.normal(kx, (batch, in_dim), jnp.float32)
    w_mu, b_mu, w_sigma, b_sigma = init_params(kp, in_dim, out_dim)

    # One-time parameter packing (hoisted out of the per-call forward).
    w_cat, b_cat, od = prepare_params(w_mu, b_mu, w_sigma, b_sigma)

    fwd = jax.jit(functools.partial(dualnet_forward, out_dim=od))
    mu, sigma = fwd(x, w_cat, b_cat)
    jax.block_until_ready((mu, sigma))

    # Reference check in plain JAX (same math as the PyTorch forward).
    ref_mu = jnp.tanh(x @ w_mu.T + b_mu)
    ref_sigma = jax.nn.softplus(x @ w_sigma.T + b_sigma) + 1e-5
    assert mu.shape == (batch, out_dim) and sigma.shape == (batch, out_dim)
    assert jnp.allclose(mu, ref_mu, atol=1e-5), "mu mismatch"
    assert jnp.allclose(sigma, ref_sigma, atol=1e-5), "sigma mismatch"

    print("KERNEL_OK")
</pallas_src>

<mosaic_0001>
module attributes {stable_mosaic.version = 11 : i64} {
  func.func @_dualnet_kernel(%arg0: i32, %arg1: memref<8x32xf32, #tpu.memory_space<vmem>>, %arg2: memref<32x128xf32, #tpu.memory_space<vmem>>, %arg3: memref<1x128xf32, #tpu.memory_space<vmem>>, %arg4: memref<8x128xf32, #tpu.memory_space<vmem>>) attributes {dimension_semantics = [#tpu.dimension_semantics<parallel>], iteration_bounds = array<i64: 1>, scalar_prefetch = 0 : i64, scratch_operands = 0 : i64, tpu.core_type = #tpu.core_type<tc>, window_params = [{transform_indices = @transform_0, window_bounds = array<i64: 8, 32>}, {pipeline_mode = #tpu.pipeline_mode<synchronous>, transform_indices = @transform_1, window_bounds = array<i64: 32, 128>}, {pipeline_mode = #tpu.pipeline_mode<synchronous>, transform_indices = @transform_2, window_bounds = array<i64: 1, 128>}, {transform_indices = @transform_3, window_bounds = array<i64: 8, 128>}]} {
    %c0 = arith.constant 0 : index
    %c0_0 = arith.constant 0 : index
    %0 = vector.load %arg1[%c0, %c0_0] : memref<8x32xf32, #tpu.memory_space<vmem>>, vector<8x32xf32>
    %c0_1 = arith.constant 0 : index
    %c0_2 = arith.constant 0 : index
    %1 = vector.load %arg2[%c0_1, %c0_2] : memref<32x128xf32, #tpu.memory_space<vmem>>, vector<32x128xf32>
    %cst = arith.constant dense<0.000000e+00> : vector<8x128xf32>
    %2 = tpu.matmul %0, %1, %cst {dimension_numbers = #tpu.dot_dimension_numbers<[1], [0], [0], [1], [0, 0, 1, 1], [], []>} : vector<8x32xf32>, vector<32x128xf32>, vector<8x128xf32> -> vector<8x128xf32>
    %c0_3 = arith.constant 0 : index
    %c0_4 = arith.constant 0 : index
    %3 = vector.load %arg3[%c0_3, %c0_4] : memref<1x128xf32, #tpu.memory_space<vmem>>, vector<1x128xf32>
    %4 = vector.broadcast %3 : vector<1x128xf32> to vector<8x128xf32>
    %5 = arith.addf %2, %4 : vector<8x128xf32>
    %6 = math.tanh %5 : vector<8x128xf32>
    %cst_5 = arith.constant 0.000000e+00 : f32
    %7 = vector.broadcast %cst_5 : f32 to vector<8x128xf32>
    %8 = arith.maximumf %5, %7 : vector<8x128xf32>
    %9 = math.absf %5 : vector<8x128xf32>
    %cst_6 = arith.constant 0.000000e+00 : f32
    %10 = vector.broadcast %cst_6 : f32 to vector<8x128xf32>
    %11 = arith.subf %10, %9 : vector<8x128xf32>
    %12 = math.exp %11 : vector<8x128xf32>
    %13 = math.log1p %12 : vector<8x128xf32>
    %14 = arith.addf %8, %13 : vector<8x128xf32>
    %15 = tpu.iota {dimensions = array<i32: 1>} : vector<8x128xi32>
    %c32_i32 = arith.constant 32 : i32
    %16 = vector.broadcast %c32_i32 : i32 to vector<8x128xi32>
    %17 = arith.cmpi slt, %15, %16 : vector<8x128xi32>
    %cst_7 = arith.constant 9.99999974E-6 : f32
    %18 = vector.broadcast %cst_7 : f32 to vector<8x128xf32>
    %19 = arith.addf %14, %18 : vector<8x128xf32>
    %20 = arith.select %17, %6, %19 : vector<8x128xi1>, vector<8x128xf32>
    %c0_8 = arith.constant 0 : index
    %c0_9 = arith.constant 0 : index
    %21 = vector.load %arg4[%c0_8, %c0_9] : memref<8x128xf32, #tpu.memory_space<vmem>>, vector<8x128xf32>
    tpu.vector_store %arg4[%c0_8, %c0_9], %20 {strides = array<i32>} : memref<8x128xf32, #tpu.memory_space<vmem>>, vector<8x128xf32>,
    return
  }
  func.func @transform_0(%arg0: i32) -> (i32, i32) {
    %c0_i32 = arith.constant 0 : i32
    %c0_i32_0 = arith.constant 0 : i32
    return %arg0, %c0_i32 : i32, i32
  }
  func.func @transform_1(%arg0: i32) -> (i32, i32) {
    %c0_i32 = arith.constant 0 : i32
    %c0_i32_0 = arith.constant 0 : i32
    %c0_i32_1 = arith.constant 0 : i32
    return %c0_i32, %c0_i32_0 : i32, i32
  }
  func.func @transform_2(%arg0: i32) -> (i32, i32) {
    %c0_i32 = arith.constant 0 : i32
    %c0_i32_0 = arith.constant 0 : i32
    %c0_i32_1 = arith.constant 0 : i32
    return %c0_i32, %c0_i32_0 : i32, i32
  }
  func.func @transform_3(%arg0: i32) -> (i32, i32) {
    %c0_i32 = arith.constant 0 : i32
    %c0_i32_0 = arith.constant 0 : i32
    return %arg0, %c0_i32 : i32, i32
  }
}

</mosaic_0001>

<llo_original>
// kernel: dualnet_forward.1
$region0: #{dualnet_forward.1}
  #allocation0 [shape = 'u32[]', space=smem, size = 0x4, offset = 0x4, fixed_abs, tag = 'smem constant byte address 0x4 - core index']
  #allocation1 [shape = 'u32[144,128]{1,0:T(1,128)}', space=vmem, size = 0x12000, scoped, tag = 'internal scratch']
  %s0 = inlined_call_operand.hbm [shape: f32[8,32], index: 0, kind: input, shape index: {}]
  %s1 = inlined_call_operand.hbm [shape: f32[32,128], index: 1, kind: input, shape index: {}]
  %s2 = inlined_call_operand.vmem [shape: f32[1,128], index: 2, kind: input, shape index: {}]
  %s3 = inlined_call_operand.vmem [shape: f32[8,128], index: 3, kind: output, shape index: {}]
  %s4 = sld [smem:[#allocation0]]
  $region30: #{dualnet_forward.1} parent=0
    _
  %s6 = ssub.s32 1, %s4
  %s7 = scalar_select 0, %s6, %s4
  $region1: #{dualnet_forward.1} parent=0
    #allocation2 [shape = 'u8[4096]{0}', space=vmem, size = 0x1000, scoped, tag = 'input window, operand 0, single buffered']
    #allocation3 [shape = 's32[1]{0}', space=sflag, size = 0x4, scoped, tag = 'scoped memory for dualnet_forward.1']
    #allocation4 [shape = 'u8[16384]{0}', space=vmem, size = 0x4000, scoped, tag = 'input window, operand 1, single buffered']
    #allocation5 [shape = 's32[1]{0}', space=sflag, size = 0x4, scoped, tag = 'scoped memory for dualnet_forward.1']
    %8 = vsyncpa [#allocation3], 0
    %9 = vsyncpa [#allocation5], 0
    // Predicated region
    $region2: #{dualnet_forward.1} parent=1 // pred_check
      _
    $region3: #{dualnet_forward.1} parent=1 // pred_check_branch
      %11 = sbr.rel (0) target = $region5
    $region4: #{dualnet_forward.1} parent=1 // pred_region
      %s13 = ssub.s32 128, 128
      %14 = vsyncadd [#allocation3], %s13
      %s16 = sshll.u32 [#allocation2], 4
      %s17 = int_to_ptr.vmem [resolvable:$true] %s16
      %19 = dma.hbm_to_vmem [thread:$0]  %s0, 128, %s17, [#allocation3]
    $region5: #{dualnet_forward.1} parent=1 // pred_fallthru
      _
    // Predicated region
    $region6: #{dualnet_forward.1} parent=1 // pred_check
      _
    $region7: #{dualnet_forward.1} parent=1 // pred_check_branch
      %21 = sbr.rel (0) target = $region9
    $region8: #{dualnet_forward.1} parent=1 // pred_region
      %s23 = ssub.s32 512, 512
      %24 = vsyncadd [#allocation5], %s23
      %s25 = sshll.u32 [#allocation4], 4
      %s26 = int_to_ptr.vmem [resolvable:$true] %s25
      %31 = dma.hbm_to_vmem [thread:$0]  %s1, 512, %s26, [#allocation5], 128, 128, 8
    $region9: #{dualnet_forward.1} parent=1 // pred_fallthru
      _
    // Predicated region
    $region10: #{dualnet_forward.1} parent=1 // pred_check
      _
    $region11: #{dualnet_forward.1} parent=1 // pred_check_branch
      %33 = sbr.rel (0) target = $region13
    $region12: #{dualnet_forward.1} parent=1 // pred_region
      _
    $region13: #{dualnet_forward.1} parent=1 // pred_fallthru
      _
    // Predicated region
    $region14: #{dualnet_forward.1} parent=1 // pred_check
      _
    $region15: #{dualnet_forward.1} parent=1 // pred_check_branch
      %35 = sbr.rel (0) target = $region17
    $region16: #{dualnet_forward.1} parent=1 // pred_region
      %36 = dma.done [#allocation3], 128
    $region17: #{dualnet_forward.1} parent=1 // pred_fallthru
      _
    // Predicated region
    $region18: #{dualnet_forward.1} parent=1 // pred_check
      _
    $region19: #{dualnet_forward.1} parent=1 // pred_check_branch
      %38 = sbr.rel (0) target = $region21
    $region20: #{dualnet_forward.1} parent=1 // pred_region
      %39 = dma.done [#allocation5], 512
    $region21: #{dualnet_forward.1} parent=1 // pred_fallthru
      _
    %v40 = vld [vmem:[#allocation2] sm:$0xff]
    %v41 = vld [vmem:[#allocation4] sm:$0xff]
    %v42 = vld [vmem:[#allocation4 + $0x8] sm:$0xff]
    %v43 = vld [vmem:[#allocation4 + $0x10] sm:$0xff]
    %v44 = vld [vmem:[#allocation4 + $0x18] sm:$0xff]
    %v45 = vld [vmem:[%s2] sm:$0x1]
    %v47 = vlaneseq
    %v48 = vshrl.u32 %v47, 7
    %v49 = vsub.s32 0, %v48
    %v50 = vrot.slane %v45, %v49
    %vm52 = vcmask 261120
    %v54 = vsel %vm52, %v40, 0
    %56 = vmatprep.subr.mxu0 0.0
    %57 = vmatpush1.msra.mxu0 0.0
    %58 = vmatprep.subr.mxu0 0.0
    %59 = vmatpush1.msra.mxu0 0.0
    %60 = vmatprep.subr.mxu0 0.0
    %61 = vmatpush1.msra.mxu0 0.0
    %62 = vmatprep.subr.mxu0 0.0
    %63 = vmatpush1.msra.mxu0 0.0
    %64 = vmatprep.subr.mxu0 0.0
    %65 = vmatpush1.msra.mxu0 0.0
    %66 = vmatprep.subr.mxu0 0.0
    %67 = vmatpush1.msra.mxu0 0.0
    %68 = vmatprep.subr.mxu0 0.0
    %69 = vmatpush1.msra.mxu0 0.0
    %70 = vmatprep.subr.mxu0 0.0
    %71 = vmatpush1.msra.mxu0 0.0
    %72 = vmatprep.subr.mxu0 0.0
    %73 = vmatpush1.msra.mxu0 0.0
    %74 = vmatprep.subr.mxu0 0.0
    %75 = vmatpush1.msra.mxu0 0.0
    %76 = vmatprep.subr.mxu0 0.0
    %77 = vmatpush1.msra.mxu0 0.0
    %78 = vmatprep.subr.mxu0 0.0
    %79 = vmatpush1.msra.mxu0 0.0
    %80 = vmatprep.subr.mxu0 0.0
    %81 = vmatpush1.msra.mxu0 %v44
    %82 = vmatprep.subr.mxu0 0.0
    %83 = vmatpush1.msra.mxu0 %v43
    %84 = vmatprep.subr.mxu0 0.0
    %85 = vmatpush1.msra.mxu0 %v42
    %86 = vmatprep.subr.mxu0 0.0
    %87 = vmatpush1.msra.mxu0 %v41
    %88 = vmatprep.subr.mxu0 0.0
    %89 = vmatpush2.msra.mxu0 0.0
    %90 = vmatprep.subr.mxu0 0.0
    %91 = vmatpush2.msra.mxu0 0.0
    %92 = vmatprep.subr.mxu0 0.0
    %93 = vmatpush2.msra.mxu0 0.0
    %94 = vmatprep.subr.mxu0 0.0
    %95 = vmatpush2.msra.mxu0 0.0
    %96 = vmatprep.subr.mxu0 0.0
    %97 = vmatpush2.msra.mxu0 0.0
    %98 = vmatprep.subr.mxu0 0.0
    %99 = vmatpush2.msra.mxu0 0.0
    %100 = vmatprep.subr.mxu0 0.0
    %101 = vmatpush2.msra.mxu0 0.0
    %102 = vmatprep.subr.mxu0 0.0
    %103 = vmatpush2.msra.mxu0 0.0
    %104 = vmatprep.subr.mxu0 0.0
    %105 = vmatpush2.msra.mxu0 0.0
    %106 = vmatprep.subr.mxu0 0.0
    %107 = vmatpush2.msra.mxu0 0.0
    %108 = vmatprep.subr.mxu0 0.0
    %109 = vmatpush2.msra.mxu0 0.0
    %110 = vmatprep.subr.mxu0 0.0
    %111 = vmatpush2.msra.mxu0 0.0
    %112 = vmatprep.subr.mxu0 0.0
    %113 = vmatpush2.msra.mxu0 0.0
    %114 = vmatprep.subr.mxu0 0.0
    %115 = vmatpush2.msra.mxu0 0.0
    %116 = vmatprep.subr.mxu0 0.0
    %117 = vmatpush2.msra.mxu0 0.0
    %118 = vmatprep.subr.mxu0 0.0
    %119 = vmatpush2.msra.mxu0 0.0
    %120 = vmatprep.mubr.f32.mxu0 0.0
    %121 = vmatmul.mubr.f32.gmra.mxu0 %v54
    %v122 = vpop.f32.mrf.mxu0
    %v123 = vadd.f32 %v50, %v122
    %v124 = vpop.f32.mrf.mxu0
    %125 = vdwg.mxu0
    %v126 = vtanh.pop %v123
    %v127 = vmax.f32 %v123, 0.0
    %v128 = vand.u32 2147483647, %v123
    %v129 = vsub.f32 0.0, %v128
    %v130 = vmul.f32 %v129, 1.442695
    %v131 = vpow.pop %v130
    %v132 = vadd.f32 %v131, 1.0
    %v133 = vlog2.pop %v132
    %v134 = vmul.f32 %v133, 0.6931472
    %v135 = vmul.f32 -0.5, %v131
    %v136 = vadd.f32 %v135, 1.0
    %v137 = vmul.f32 %v136, %v131
    %v138 = vand.u32 2147483647, %v131
    %vm139 = vcmp.lt.f32.partialorder %v138, 0.0004427343
    %v140 = vsel %vm139, %v137, %v134
    %v141 = vadd.f32 %v127, %v140
    %v142 = vlaneseq
    %v143 = vand.u32 %v142, 127
    %vm144 = vcmp.lt.s32.totalorder %v143, 32
    %v145 = vadd.f32 %v141, 1e-05
    %v146 = vsel %vm144, %v126, %v145
    %147 = vst [vmem:[%s3] sm:$0xff] %v146
    // Predicated region
    $region22: #{dualnet_forward.1} parent=1 // pred_check
      _
    $region23: #{dualnet_forward.1} parent=1 // pred_check_branch
      %149 = sbr.rel (0) target = $region25
    $region24: #{dualnet_forward.1} parent=1 // pred_region
      _
    $region25: #{dualnet_forward.1} parent=1 // pred_fallthru
      _
    // Predicated region
    $region26: #{dualnet_forward.1} parent=1 // pred_check
      _
    $region27: #{dualnet_forward.1} parent=1 // pred_check_branch
      %151 = sbr.rel (0) target = $region29
    $region28: #{dualnet_forward.1} parent=1 // pred_region
      _
    $region29: #{dualnet_forward.1} parent=1 // pred_fallthru
      _
    %152 = vsyncpa [#allocation3], 1
    %153 = vsyncpa [#allocation5], 1

</llo_original>
